<compile_context>
chip_gen: v7x
topology: tpu7x:2x2x1
jax: 0.10.0
libtpu: 0.0.40
codegen_flags: <defaults>
</compile_context>

<pallas_src>
import functools
import math

import jax
import jax.numpy as jnp
import numpy as np
from jax.experimental import pallas as pl
from jax.experimental.pallas import tpu as pltpu


# ------------------------- Pallas kernel -------------------------

def _upsample_kernel(slab_ref, w_ref, b_ref, o_ref):
    """One fused fat-K matmul per (batch, M-tile) grid step.

    slab_ref: (1, TM, 9*C)  bf16  shift-concatenated activations (lane-dense)
    w_ref   : (9*C, 4*C)    bf16  packed ConvTranspose2d weights (shift-major K)
    b_ref   : (1, 4*C)      f32   bias replicated over the 4 output phases
    o_ref   : (1, TM, 4*C)  f32   output tokens, channels-last
    """
    acc = jnp.dot(slab_ref[0], w_ref[...], preferred_element_type=jnp.float32)
    o_ref[0] = acc + b_ref[...]


# ------------------------- weight packing (once, at init) -------------------------

def pack_convT_params(w, b):
    """Pack torch-layout ConvTranspose2d params (Cin, Cout, 4, 4) / (Cout,) into
    the kernel's (9*Cin, 4*Cout) bf16 weight slab and (1, 4*Cout) f32 bias.

    Output phase (ry, rx) at spatial shift (dy, dx) uses kernel tap
    (ky, kx) = (ry + 3 - 2*dy, rx + 3 - 2*dx) when that tap exists; missing
    taps are zero.  Done ONCE in numpy — not on the per-call jitted path.
    """
    w = np.asarray(w, np.float32)
    b = np.asarray(b, np.float32)
    Cin, Cout = w.shape[0], w.shape[1]
    wp = np.zeros((9, Cin, 4 * Cout), np.float32)
    for dy in range(3):
        for dx in range(3):
            for ry in range(2):
                for rx in range(2):
                    ky = ry + 3 - 2 * dy
                    kx = rx + 3 - 2 * dx
                    if 0 <= ky < 4 and 0 <= kx < 4:
                        sub = ry * 2 + rx
                        wp[dy * 3 + dx, :, sub * Cout:(sub + 1) * Cout] = w[:, :, ky, kx]
    wp = wp.reshape(9 * Cin, 4 * Cout)
    bp = np.tile(b, 4).reshape(1, 4 * Cout)
    return jnp.asarray(wp, jnp.bfloat16), jnp.asarray(bp, jnp.float32)


# ------------------------- wrapper -------------------------

@jax.jit
def upsample(x_nchw, t, wp_bf16, bp_f32):
    """UpSample.forward: x -> ConvTranspose2d(n_ch, n_ch, 4, 2, 1)(x);  t is ignored."""
    del t  # faithful to the reference forward: `_ = t`
    B, C, H, W = x_nchw.shape
    HW = H * W

    # NCHW -> padded NHWC -> shift-concatenated bf16 slab (tiny-size im2col,
    # fused by XLA; keeps the Pallas body a single MXU dot).
    x_nhwc = jnp.transpose(x_nchw, (0, 2, 3, 1))
    xp = jnp.pad(x_nhwc, ((0, 0), (1, 1), (1, 1), (0, 0)))
    slab = jnp.concatenate(
        [xp[:, dy:dy + H, dx:dx + W, :] for dy in range(3) for dx in range(3)],
        axis=-1,
    ).reshape(B, HW, 9 * C).astype(jnp.bfloat16)

    # M tile: 128 rows keeps the f32 dot result at 16 vregs; >=2 grid steps
    # per TensorCore on v7x when combined with the parallel batch axis.
    TM = 128 if HW % 128 == 0 else HW
    grid = (B, HW // TM)

    out = pl.pallas_call(
        _upsample_kernel,
        out_shape=jax.ShapeDtypeStruct((B, HW, 4 * C), jnp.float32),
        grid=grid,
        in_specs=[
            pl.BlockSpec((1, TM, 9 * C), lambda bb, mm: (bb, mm, 0)),
            pl.BlockSpec((9 * C, 4 * C), lambda bb, mm: (0, 0)),   # resident weights
            pl.BlockSpec((1, 4 * C), lambda bb, mm: (0, 0)),       # resident bias
        ],
        out_specs=pl.BlockSpec((1, TM, 4 * C), lambda bb, mm: (bb, mm, 0)),
        compiler_params=pltpu.CompilerParams(
            dimension_semantics=("parallel", "parallel")),
    )(slab, wp_bf16, bp_f32)

    # (B, HW, [ry, rx, C]) -> pixel-shuffle -> (B, C, 2H, 2W)
    # TODO(synk): if the consumer can take channels-last tokens, drop this
    # re-layout and consume the lane-dense kernel output directly.
    out = out.reshape(B, H, W, 2, 2, C)
    out = jnp.transpose(out, (0, 5, 1, 3, 2, 4)).reshape(B, C, 2 * H, 2 * W)
    return out


# ------------------------- pure-JAX reference (for verification) -------------------------

def _ref_upsample(x, t, w, b):
    """ConvTranspose2d(k=4, s=2, p=1) via lhs-dilated conv with the 180-rotated,
    in/out-swapped kernel (exactly PyTorch's semantics), in full f32."""
    del t
    w_flip = w[:, :, ::-1, ::-1]                       # rotate 180
    w_oihw = jnp.transpose(w_flip, (1, 0, 2, 3))       # (Cout, Cin, 4, 4)
    y = jax.lax.conv_general_dilated(
        x, w_oihw, window_strides=(1, 1),
        padding=((2, 2), (2, 2)), lhs_dilation=(2, 2),
        dimension_numbers=('NCHW', 'OIHW', 'NCHW'),
        precision=jax.lax.Precision.HIGHEST)
    return y + b[None, :, None, None]


# ------------------------- main -------------------------

if __name__ == "__main__":
    B, C, H, W = 2, 32, 16, 16      # n_ch = 32  -> 4*C = 128 lane-dense output
    time_ch = 32

    key = jax.random.PRNGKey(0)
    kx, kt, kw, kb = jax.random.split(key, 4)
    x = jax.random.normal(kx, (B, C, H, W), jnp.float32)       # NCHW, as in PyTorch
    t = jax.random.normal(kt, (B, time_ch), jnp.float32)       # unused by forward
    bound = 1.0 / math.sqrt(C * 4 * 4)
    w = jax.random.uniform(kw, (C, C, 4, 4), jnp.float32, -bound, bound)  # torch layout (Cin, Cout, kH, kW)
    b = jax.random.uniform(kb, (C,), jnp.float32, -bound, bound)

    # Pack weights once at init (hoisted off the per-call path).
    wp_bf16, bp_f32 = pack_convT_params(w, b)

    out = upsample(x, t, wp_bf16, bp_f32)
    out = jax.block_until_ready(out)
    assert out.shape == (B, C, 2 * H, 2 * W)

    ref = jax.block_until_ready(_ref_upsample(x, t, w, b))
    # bf16 MXU operands with f32 accumulation: quantization error << 2e-2, while
    # any packing / phase-mapping bug would produce O(1)-magnitude differences.
    np.testing.assert_allclose(np.asarray(out), np.asarray(ref), rtol=2e-2, atol=2e-2)

    print("KERNEL_OK")
</pallas_src>

<mosaic_0001>
module attributes {stable_mosaic.version = 11 : i64} {
  func.func @_upsample_kernel(%arg0: i32, %arg1: i32, %arg2: memref<1x128x288xbf16, #tpu.memory_space<vmem>>, %arg3: memref<288x128xbf16, #tpu.memory_space<vmem>>, %arg4: memref<1x128xf32, #tpu.memory_space<vmem>>, %arg5: memref<1x128x128xf32, #tpu.memory_space<vmem>>) attributes {dimension_semantics = [#tpu.dimension_semantics<parallel>, #tpu.dimension_semantics<parallel>], iteration_bounds = array<i64: 2, 2>, scalar_prefetch = 0 : i64, scratch_operands = 0 : i64, tpu.core_type = #tpu.core_type<tc>, window_params = [{transform_indices = @transform_0, window_bounds = array<i64: 1, 128, 288>}, {pipeline_mode = #tpu.pipeline_mode<synchronous>, transform_indices = @transform_1, window_bounds = array<i64: 288, 128>}, {pipeline_mode = #tpu.pipeline_mode<synchronous>, transform_indices = @transform_2, window_bounds = array<i64: 1, 128>}, {transform_indices = @transform_3, window_bounds = array<i64: 1, 128, 128>}]} {
    %c0 = arith.constant 0 : index
    %c0_0 = arith.constant 0 : index
    %c0_1 = arith.constant 0 : index
    %0 = vector.load %arg2[%c0, %c0_0, %c0_1] : memref<1x128x288xbf16, #tpu.memory_space<vmem>>, vector<1x128x288xbf16>
    %1 = vector.shape_cast %0 : vector<1x128x288xbf16> to vector<128x288xbf16>
    %c0_2 = arith.constant 0 : index
    %c0_3 = arith.constant 0 : index
    %2 = vector.load %arg3[%c0_2, %c0_3] : memref<288x128xbf16, #tpu.memory_space<vmem>>, vector<288x128xbf16>
    %cst = arith.constant dense<0.000000e+00> : vector<128x128xf32>
    %3 = tpu.matmul %1, %2, %cst {dimension_numbers = #tpu.dot_dimension_numbers<[1], [0], [0], [1], [0, 0, 1, 1], [], []>} : vector<128x288xbf16>, vector<288x128xbf16>, vector<128x128xf32> -> vector<128x128xf32>
    %c0_4 = arith.constant 0 : index
    %c0_5 = arith.constant 0 : index
    %4 = vector.load %arg4[%c0_4, %c0_5] : memref<1x128xf32, #tpu.memory_space<vmem>>, vector<1x128xf32>
    %5 = vector.broadcast %4 : vector<1x128xf32> to vector<128x128xf32>
    %6 = arith.addf %3, %5 : vector<128x128xf32>
    %c0_6 = arith.constant 0 : index
    %c0_7 = arith.constant 0 : index
    %c0_8 = arith.constant 0 : index
    %7 = vector.load %arg5[%c0_6, %c0_7, %c0_8] : memref<1x128x128xf32, #tpu.memory_space<vmem>>, vector<1x128x128xf32>
    %8 = vector.shape_cast %7 : vector<1x128x128xf32> to vector<128x128xf32>
    %9 = vector.shape_cast %6 : vector<128x128xf32> to vector<1x128x128xf32>
    tpu.vector_store %arg5[%c0_6, %c0_7, %c0_8], %9 {strides = array<i32>} : memref<1x128x128xf32, #tpu.memory_space<vmem>>, vector<1x128x128xf32>,
    return
  }
  func.func @transform_0(%arg0: i32, %arg1: i32) -> (i32, i32, i32) {
    %c0_i32 = arith.constant 0 : i32
    %c0_i32_0 = arith.constant 0 : i32
    return %arg0, %arg1, %c0_i32 : i32, i32, i32
  }
  func.func @transform_1(%arg0: i32, %arg1: i32) -> (i32, i32) {
    %c0_i32 = arith.constant 0 : i32
    %c0_i32_0 = arith.constant 0 : i32
    %c0_i32_1 = arith.constant 0 : i32
    return %c0_i32, %c0_i32_0 : i32, i32
  }
  func.func @transform_2(%arg0: i32, %arg1: i32) -> (i32, i32) {
    %c0_i32 = arith.constant 0 : i32
    %c0_i32_0 = arith.constant 0 : i32
    %c0_i32_1 = arith.constant 0 : i32
    return %c0_i32, %c0_i32_0 : i32, i32
  }
  func.func @transform_3(%arg0: i32, %arg1: i32) -> (i32, i32, i32) {
    %c0_i32 = arith.constant 0 : i32
    %c0_i32_0 = arith.constant 0 : i32
    return %arg0, %arg1, %c0_i32 : i32, i32, i32
  }
}

</mosaic_0001>

<llo_original>
// kernel: upsample.1
$region0: #{upsample.1}
  #allocation0 [shape = 'u32[]', space=smem, size = 0x4, offset = 0x4, fixed_abs, tag = 'smem constant byte address 0x4 - core index']
  #allocation1 [shape = 'u32[144,128]{1,0:T(1,128)}', space=vmem, size = 0x12000, scoped, tag = 'internal scratch']
  %s0 = inlined_call_operand.vmem [shape: bf16[2,256,288], index: 0, kind: input, shape index: {}]
  %s1 = inlined_call_operand.vmem [shape: bf16[288,128], index: 1, kind: input, shape index: {}]
  %s2 = inlined_call_operand.vmem [shape: f32[1,128], index: 2, kind: input, shape index: {}]
  %s3 = inlined_call_operand.vmem [shape: f32[2,256,128], index: 3, kind: output, shape index: {}]
  %s4 = sld [smem:[#allocation0]]
  $region45: #{upsample.1} parent=0
    _
  %s6 = ssub.s32 1, %s4
  %s7 = scalar_select 0, %s6, %s4
  loop: start=0, step=1, limit=6
  $region2: #{upsample.1} parent=0 // loop_pre_header
    _
  $region3: #{upsample.1} parent=0 // loop_header
    %s9 = sphi 0, %s13
    %p10 = scmp.ge.s32.totalorder %s9, 6
    %s16 = sphi 0, %s28
    %s17 = sphi 0, %s24
    %s18 = sphi 0, %s16
    %s19 = sphi 0, %s17
    %s20 = sphi 0, %s18
    %s21 = sphi 0, %s19
    %s33 = sphi 0, %s35
    %s36 = sphi 0, %s33
    %s37 = sphi 0, %s36
    %s53 = sphi 0, %s37
    %s57 = sphi 0, %s57
    %s59 = sphi 0, %s57
    %s60 = sphi 0, %s59
    %s74 = sphi 0, %s60
    %s78 = sphi 0, %s78
    %s80 = sphi 0, %s78
    %s81 = sphi 0, %s80
    %s95 = sphi 0, %s81
    %s103 = sphi 0, %s105
    %s106 = sphi 0, %s103
    %s107 = sphi 0, %s106
    %s123 = sphi 0, %s107
  $region4: #{upsample.1} parent=0 // loop_header_branch
    %12 = sbr.rel (%p10) target = $region8
  $region5: #{upsample.1} parent=0 // loop_body
    %s14 = ssub.s32 %s9, 1
    %s15 = ssub.s32 %s9, 2
    %s22 = sadd.s32 1, %s17
    %p23 = scmp.ge.s32.totalorder %s22, 2
    %s24 = scalar_select %p23, 0, %s22
    %s25 = sadd.s32 1, %s16
    %s26 = scalar_select %p23, %s25, %s16
    %p27 = scmp.ge.s32.totalorder %s26, 2
    %s28 = scalar_select %p27, 0, %s26
    %s29 = ssub.s32 %s16, %s28
    %s30 = ssub.s32 %s17, %s24
    %s31 = sor.u32 %s29, %s30
    %p32 = scmp.eq.s32.totalorder %s31, 0
    %s34 = sadd.s32 %s33, 1
    %s35 = scalar_select %p32, %s33, %s34
    %p38 = pneg %p32
    %p39 = scmp.eq.s32.totalorder %s9, 3
    %p40 = por %p38, %p39
    %p41 = scmp.ne.s32.totalorder %s33, %s36
    %p42 = scmp.eq.s32.totalorder %s9, 0
    %p43 = por %p41, %p42
    %p44 = scmp.ne.s32.totalorder %s33, %s36
    %p45 = scmp.eq.s32.totalorder %s14, 3
    %p46 = por %p44, %p45
    %p47 = scmp.ne.s32.totalorder %s36, %s37
    %p48 = scmp.eq.s32.totalorder %s14, 0
    %p49 = por %p47, %p48
    %p50 = scmp.ne.s32.totalorder %s36, %s37
    %p51 = scmp.eq.s32.totalorder %s15, 3
    %p52 = por %p50, %p51
    %p54 = scmp.ne.s32.totalorder %s37, %s53
    %p55 = scmp.eq.s32.totalorder %s15, 0
    %p56 = por %p54, %p55
    %s58 = sadd.s32 %s57, 1
    %p61 = scmp.eq.s32.totalorder %s9, 3
    %p62 = scmp.ne.s32.totalorder %s57, %s59
    %p63 = scmp.eq.s32.totalorder %s9, 0
    %p64 = por %p62, %p63
    %p65 = scmp.ne.s32.totalorder %s57, %s59
    %p66 = scmp.eq.s32.totalorder %s14, 3
    %p67 = por %p65, %p66
    %p68 = scmp.ne.s32.totalorder %s59, %s60
    %p69 = scmp.eq.s32.totalorder %s14, 0
    %p70 = por %p68, %p69
    %p71 = scmp.ne.s32.totalorder %s59, %s60
    %p72 = scmp.eq.s32.totalorder %s15, 3
    %p73 = por %p71, %p72
    %p75 = scmp.ne.s32.totalorder %s60, %s74
    %p76 = scmp.eq.s32.totalorder %s15, 0
    %p77 = por %p75, %p76
    %s79 = sadd.s32 %s78, 1
    %p82 = scmp.eq.s32.totalorder %s9, 3
    %p83 = scmp.ne.s32.totalorder %s78, %s80
    %p84 = scmp.eq.s32.totalorder %s9, 0
    %p85 = por %p83, %p84
    %p86 = scmp.ne.s32.totalorder %s78, %s80
    %p87 = scmp.eq.s32.totalorder %s14, 3
    %p88 = por %p86, %p87
    %p89 = scmp.ne.s32.totalorder %s80, %s81
    %p90 = scmp.eq.s32.totalorder %s14, 0
    %p91 = por %p89, %p90
    %p92 = scmp.ne.s32.totalorder %s80, %s81
    %p93 = scmp.eq.s32.totalorder %s15, 3
    %p94 = por %p92, %p93
    %p96 = scmp.ne.s32.totalorder %s81, %s95
    %p97 = scmp.eq.s32.totalorder %s15, 0
    %p98 = por %p96, %p97
    %s99 = ssub.s32 %s16, %s28
    %s100 = ssub.s32 %s17, %s24
    %s101 = sor.u32 %s99, %s100
    %p102 = scmp.eq.s32.totalorder %s101, 0
    %s104 = sadd.s32 %s103, 1
    %s105 = scalar_select %p102, %s103, %s104
    %p108 = pneg %p102
    %p109 = scmp.eq.s32.totalorder %s9, 3
    %p110 = por %p108, %p109
    %p111 = scmp.ne.s32.totalorder %s103, %s106
    %p112 = scmp.eq.s32.totalorder %s9, 0
    %p113 = por %p111, %p112
    %p114 = scmp.ne.s32.totalorder %s103, %s106
    %p115 = scmp.eq.s32.totalorder %s14, 3
    %p116 = por %p114, %p115
    %p117 = scmp.ne.s32.totalorder %s106, %s107
    %p118 = scmp.eq.s32.totalorder %s14, 0
    %p119 = por %p117, %p118
    %p120 = scmp.ne.s32.totalorder %s106, %s107
    %p121 = scmp.eq.s32.totalorder %s15, 3
    %p122 = por %p120, %p121
    %p124 = scmp.ne.s32.totalorder %s107, %s123
    %p125 = scmp.eq.s32.totalorder %s15, 0
    %p126 = por %p124, %p125
    %p127 = scmp.le.s32.totalorder 1, %s9
    %p128 = scmp.lt.s32.totalorder %s9, 5
    %p129 = pnand %p127, %p128
    %p130 = pneg %p129
    // Predicated region
    $region9: #{upsample.1} parent=5 // pred_check
      _
    $region10: #{upsample.1} parent=5 // pred_check_branch
      %132 = sbr.rel (%p129) target = $region12
    $region11: #{upsample.1} parent=5 // pred_region
      %s133 = ssub.s32 %s9, 1
      // Predicated region
      $region13: #{upsample.1} parent=11 // pred_check
        %p134 = pneg %p70
      $region14: #{upsample.1} parent=11 // pred_check_branch
        %136 = sbr.rel (%p134) target = $region16
      $region15: #{upsample.1} parent=11 // pred_region
        _
      $region16: #{upsample.1} parent=11 // pred_fallthru
        _
      // Predicated region
      $region17: #{upsample.1} parent=11 // pred_check
        %p137 = pneg %p91
      $region18: #{upsample.1} parent=11 // pred_check_branch
        %139 = sbr.rel (%p137) target = $region20
      $region19: #{upsample.1} parent=11 // pred_region
        _
      $region20: #{upsample.1} parent=11 // pred_fallthru
        _
    $region12: #{upsample.1} parent=5 // pred_fallthru
      _
    %p140 = scmp.lt.s32.totalorder %s9, 4
    // Predicated region
    $region21: #{upsample.1} parent=5 // pred_check
      %p141 = pneg %p140
    $region22: #{upsample.1} parent=5 // pred_check_branch
      %143 = sbr.rel (%p141) target = $region24
    $region23: #{upsample.1} parent=5 // pred_region
      // Predicated region
      $region25: #{upsample.1} parent=23 // pred_check
        %p144 = pneg %p43
      $region26: #{upsample.1} parent=23 // pred_check_branch
        %146 = sbr.rel (%p144) target = $region28
      $region27: #{upsample.1} parent=23 // pred_region
        %s147 = smul.u32 16, %s17
        %p148 = scmp.lt.s32.totalorder %s16, 1
        %s149 = scalar_select %p148, %s16, 1
        %p150 = scmp.lt.s32.totalorder %s147, 31
        %s151 = scalar_select %p150, %s147, 31
        %s152 = smul.addr %s151, 3
        %s153 = smul.addr %s149, 96
        %s154 = sadd.s32 %s152, %s153
        %s155 = smul.addr %s154, 4
        %s156 = scalar_lea.vmem %s0, %s155
        %s157 = smul.u32 16, %s17
      $region28: #{upsample.1} parent=23 // pred_fallthru
        _
    $region24: #{upsample.1} parent=5 // pred_fallthru
      _
    %p158 = scmp.le.s32.totalorder 1, %s9
    %p159 = scmp.lt.s32.totalorder %s9, 5
    %p160 = pnand %p158, %p159
    %p161 = pneg %p160
    // Predicated region
    $region29: #{upsample.1} parent=5 // pred_check
      _
    $region30: #{upsample.1} parent=5 // pred_check_branch
      %163 = sbr.rel (%p160) target = $region32
    $region31: #{upsample.1} parent=5 // pred_region
      %s164 = ssub.s32 %s9, 1
      %s165 = smul.u32 16, %s19
      %p166 = scmp.lt.s32.totalorder %s18, 1
      %s167 = scalar_select %p166, %s18, 1
      %p168 = scmp.lt.s32.totalorder %s165, 31
      %s169 = scalar_select %p168, %s165, 31
      %s170 = smul.addr %s169, 3
      %s171 = smul.addr %s167, 96
      %s172 = sadd.s32 %s170, %s171
      %s173 = smul.addr %s172, 4
      %s174 = scalar_lea.vmem %s0, %s173
      %p175 = pneg %p49
      %p176 = pneg %p46
      %p177 = pneg %p70
      %p178 = pneg %p67
      %p179 = pneg %p91
      %p180 = pneg %p88
      %p181 = pneg %p119
      %p182 = pneg %p116
      %s183 = smul.u32 16, %s19
      %p184 = scmp.lt.s32.totalorder %s18, 1
      %s185 = scalar_select %p184, %s18, 1
      %p186 = scmp.lt.s32.totalorder %s183, 31
      %s187 = scalar_select %p186, %s183, 31
      %s188 = smul.addr %s185, 32
      %s189 = sadd.s32 %s187, %s188
      %s190 = smul.addr %s189, 8
      %s191 = scalar_lea.vmem %s3, %s190
      %s192 = smul.u32 16, %s19
      %p193 = scmp.lt.s32.totalorder %s18, 1
      %s194 = scalar_select %p193, %s18, 1
      %p195 = scmp.lt.s32.totalorder %s192, 31
      %s196 = scalar_select %p195, %s192, 31
      %s197 = smul.addr %s196, 3
      %s198 = smul.addr %s194, 96
      %s199 = sadd.s32 %s197, %s198
      %s200 = smul.addr %s199, 4
      %s201 = scalar_lea.vmem %s0, %s200
      %s202 = smul.u32 16, %s19
      %s203 = smul.u32 16, %s19
      %p204 = scmp.lt.s32.totalorder %s18, 1
      %s205 = scalar_select %p204, %s18, 1
      %p206 = scmp.lt.s32.totalorder %s203, 31
      %s207 = scalar_select %p206, %s203, 31
      %s208 = smul.addr %s205, 32
      %s209 = sadd.s32 %s207, %s208
      %s210 = smul.addr %s209, 8
      %s211 = scalar_lea.vmem %s3, %s210
      %s212 = smul.u32 16, %s19
      %v214 = vld [vmem:[%s201] sm:$0xff]
      %v215 = vld [vmem:[%s201 + $0x8] sm:$0xf]
      %v216 = vld [vmem:[%s201 + $0xc] sm:$0xff]
      %v217 = vld [vmem:[%s201 + $0x14] sm:$0xf]
      %v218 = vld [vmem:[%s201 + $0x18] sm:$0xff]
      %v219 = vld [vmem:[%s201 + $0x20] sm:$0xf]
      %v220 = vld [vmem:[%s201 + $0x24] sm:$0xff]
      %v221 = vld [vmem:[%s201 + $0x2c] sm:$0xf]
      %v222 = vld [vmem:[%s201 + $0x30] sm:$0xff]
      %v223 = vld [vmem:[%s201 + $0x38] sm:$0xf]
      %v224 = vld [vmem:[%s201 + $0x3c] sm:$0xff]
      %v225 = vld [vmem:[%s201 + $0x44] sm:$0xf]
      %v226 = vld [vmem:[%s201 + $0x48] sm:$0xff]
      %v227 = vld [vmem:[%s201 + $0x50] sm:$0xf]
      %v228 = vld [vmem:[%s201 + $0x54] sm:$0xff]
      %v229 = vld [vmem:[%s201 + $0x5c] sm:$0xf]
      %v230 = vld [vmem:[%s201 + $0x60] sm:$0xff]
      %v231 = vld [vmem:[%s201 + $0x68] sm:$0xf]
      %v232 = vld [vmem:[%s201 + $0x6c] sm:$0xff]
      %v233 = vld [vmem:[%s201 + $0x74] sm:$0xf]
      %v234 = vld [vmem:[%s201 + $0x78] sm:$0xff]
      %v235 = vld [vmem:[%s201 + $0x80] sm:$0xf]
      %v236 = vld [vmem:[%s201 + $0x84] sm:$0xff]
      %v237 = vld [vmem:[%s201 + $0x8c] sm:$0xf]
      %v238 = vld [vmem:[%s201 + $0x90] sm:$0xff]
      %v239 = vld [vmem:[%s201 + $0x98] sm:$0xf]
      %v240 = vld [vmem:[%s201 + $0x9c] sm:$0xff]
      %v241 = vld [vmem:[%s201 + $0xa4] sm:$0xf]
      %v242 = vld [vmem:[%s201 + $0xa8] sm:$0xff]
      %v243 = vld [vmem:[%s201 + $0xb0] sm:$0xf]
      %v244 = vld [vmem:[%s201 + $0xb4] sm:$0xff]
      %v245 = vld [vmem:[%s201 + $0xbc] sm:$0xf]
      %v246 = vld [vmem:[%s1] sm:$0xf]
      %v247 = vld [vmem:[%s1 + $0x4] sm:$0xf]
      %v248 = vld [vmem:[%s1 + $0x8] sm:$0xf]
      %v249 = vld [vmem:[%s1 + $0xc] sm:$0xf]
      %v250 = vld [vmem:[%s1 + $0x10] sm:$0xf]
      %v251 = vld [vmem:[%s1 + $0x14] sm:$0xf]
      %v252 = vld [vmem:[%s1 + $0x18] sm:$0xf]
      %v253 = vld [vmem:[%s1 + $0x1c] sm:$0xf]
      %v254 = vld [vmem:[%s1 + $0x20] sm:$0xf]
      %v255 = vld [vmem:[%s1 + $0x24] sm:$0xf]
      %v256 = vld [vmem:[%s1 + $0x28] sm:$0xf]
      %v257 = vld [vmem:[%s1 + $0x2c] sm:$0xf]
      %v258 = vld [vmem:[%s1 + $0x30] sm:$0xf]
      %v259 = vld [vmem:[%s1 + $0x34] sm:$0xf]
      %v260 = vld [vmem:[%s1 + $0x38] sm:$0xf]
      %v261 = vld [vmem:[%s1 + $0x3c] sm:$0xf]
      %v262 = vld [vmem:[%s1 + $0x40] sm:$0xf]
      %v263 = vld [vmem:[%s1 + $0x44] sm:$0xf]
      %v264 = vld [vmem:[%s1 + $0x48] sm:$0xf]
      %v265 = vld [vmem:[%s1 + $0x4c] sm:$0xf]
      %v266 = vld [vmem:[%s1 + $0x50] sm:$0xf]
      %v267 = vld [vmem:[%s1 + $0x54] sm:$0xf]
      %v268 = vld [vmem:[%s1 + $0x58] sm:$0xf]
      %v269 = vld [vmem:[%s1 + $0x5c] sm:$0xf]
      %v270 = vld [vmem:[%s1 + $0x60] sm:$0xf]
      %v271 = vld [vmem:[%s1 + $0x64] sm:$0xf]
      %v272 = vld [vmem:[%s1 + $0x68] sm:$0xf]
      %v273 = vld [vmem:[%s1 + $0x6c] sm:$0xf]
      %v274 = vld [vmem:[%s1 + $0x70] sm:$0xf]
      %v275 = vld [vmem:[%s1 + $0x74] sm:$0xf]
      %v276 = vld [vmem:[%s1 + $0x78] sm:$0xf]
      %v277 = vld [vmem:[%s1 + $0x7c] sm:$0xf]
      %v278 = vld [vmem:[%s1 + $0x80] sm:$0xf]
      %v279 = vld [vmem:[%s1 + $0x84] sm:$0xf]
      %v280 = vld [vmem:[%s1 + $0x88] sm:$0xf]
      %v281 = vld [vmem:[%s1 + $0x8c] sm:$0xf]
      %v282 = vld [vmem:[%s2] sm:$0x1]
      %v284 = vlaneseq
      %v285 = vshrl.u32 %v284, 7
      %v286 = vsub.s32 0, %v285
      %v287 = vrot.slane %v282, %v286
      %v321 = vunpack.c.l.b16 %v214
      %v322 = vunpack.c.h.b16 %v214
      %v323 = vunpack.c.l.b16 %v215
      %v324 = vunpack.c.l.b16 %v216
      %v325 = vunpack.c.h.b16 %v216
      %v326 = vunpack.c.l.b16 %v217
      %v327 = vunpack.c.l.b16 %v218
      %v328 = vunpack.c.h.b16 %v218
      %v329 = vunpack.c.l.b16 %v219
      %v330 = vunpack.c.l.b16 %v220
      %v331 = vunpack.c.h.b16 %v220
      %v332 = vunpack.c.l.b16 %v221
      %v333 = vunpack.c.l.b16 %v222
      %v334 = vunpack.c.h.b16 %v222
      %v335 = vunpack.c.l.b16 %v223
      %v336 = vunpack.c.l.b16 %v224
      %v337 = vunpack.c.h.b16 %v224
      %v338 = vunpack.c.l.b16 %v225
      %v339 = vunpack.c.l.b16 %v226
      %v340 = vunpack.c.h.b16 %v226
      %v341 = vunpack.c.l.b16 %v227
      %v342 = vunpack.c.l.b16 %v228
      %v343 = vunpack.c.h.b16 %v228
      %v344 = vunpack.c.l.b16 %v229
      %v345 = vunpack.c.l.b16 %v230
      %v346 = vunpack.c.h.b16 %v230
      %v347 = vunpack.c.l.b16 %v231
      %v348 = vunpack.c.l.b16 %v232
      %v349 = vunpack.c.h.b16 %v232
      %v350 = vunpack.c.l.b16 %v233
      %v351 = vunpack.c.l.b16 %v234
      %v352 = vunpack.c.h.b16 %v234
      %v353 = vunpack.c.l.b16 %v235
      %v354 = vunpack.c.l.b16 %v236
      %v355 = vunpack.c.h.b16 %v236
      %v356 = vunpack.c.l.b16 %v237
      %v357 = vunpack.c.l.b16 %v238
      %v358 = vunpack.c.h.b16 %v238
      %v359 = vunpack.c.l.b16 %v239
      %v360 = vunpack.c.l.b16 %v240
      %v361 = vunpack.c.h.b16 %v240
      %v362 = vunpack.c.l.b16 %v241
      %v363 = vunpack.c.l.b16 %v242
      %v364 = vunpack.c.h.b16 %v242
      %v365 = vunpack.c.l.b16 %v243
      %v366 = vunpack.c.l.b16 %v244
      %v367 = vunpack.c.h.b16 %v244
      %v368 = vunpack.c.l.b16 %v245
      %v369 = vpack.c.b16 %v324, %v321
      %v370 = vpack.c.b16 %v325, %v322
      %v371 = vpack.c.b16 %v326, %v323
      %v372 = vpack.c.b16 %v330, %v327
      %v373 = vpack.c.b16 %v331, %v328
      %v374 = vpack.c.b16 %v332, %v329
      %v375 = vpack.c.b16 %v336, %v333
      %v376 = vpack.c.b16 %v337, %v334
      %v377 = vpack.c.b16 %v338, %v335
      %v378 = vpack.c.b16 %v342, %v339
      %v379 = vpack.c.b16 %v343, %v340
      %v380 = vpack.c.b16 %v344, %v341
      %v381 = vpack.c.b16 %v348, %v345
      %v382 = vpack.c.b16 %v349, %v346
      %v383 = vpack.c.b16 %v350, %v347
      %v384 = vpack.c.b16 %v354, %v351
      %v385 = vpack.c.b16 %v355, %v352
      %v386 = vpack.c.b16 %v356, %v353
      %v387 = vpack.c.b16 %v360, %v357
      %v388 = vpack.c.b16 %v361, %v358
      %v389 = vpack.c.b16 %v362, %v359
      %v390 = vpack.c.b16 %v366, %v363
      %v391 = vpack.c.b16 %v367, %v364
      %v392 = vpack.c.b16 %v368, %v365
      %v445 = vunpack.c.l.b16 %v246
      %v446 = vunpack.c.l.b16 %v247
      %v447 = vunpack.c.l.b16 %v248
      %v448 = vunpack.c.l.b16 %v249
      %v449 = vunpack.c.l.b16 %v250
      %v450 = vunpack.c.l.b16 %v251
      %v451 = vunpack.c.l.b16 %v252
      %v452 = vunpack.c.l.b16 %v253
      %v453 = vunpack.c.l.b16 %v254
      %v454 = vunpack.c.l.b16 %v255
      %v455 = vunpack.c.l.b16 %v256
      %v456 = vunpack.c.l.b16 %v257
      %v457 = vunpack.c.l.b16 %v258
      %v458 = vunpack.c.l.b16 %v259
      %v459 = vunpack.c.l.b16 %v260
      %v460 = vunpack.c.l.b16 %v261
      %v461 = vunpack.c.l.b16 %v262
      %v462 = vunpack.c.l.b16 %v263
      %v463 = vunpack.c.l.b16 %v264
      %v464 = vunpack.c.l.b16 %v265
      %v465 = vunpack.c.l.b16 %v266
      %v466 = vunpack.c.l.b16 %v267
      %v467 = vunpack.c.l.b16 %v268
      %v468 = vunpack.c.l.b16 %v269
      %v469 = vunpack.c.l.b16 %v270
      %v470 = vunpack.c.l.b16 %v271
      %v471 = vunpack.c.l.b16 %v272
      %v472 = vunpack.c.l.b16 %v273
      %v473 = vunpack.c.l.b16 %v274
      %v474 = vunpack.c.l.b16 %v275
      %v475 = vunpack.c.l.b16 %v276
      %v476 = vunpack.c.l.b16 %v277
      %v477 = vunpack.c.l.b16 %v278
      %v478 = vunpack.c.l.b16 %v279
      %v479 = vunpack.c.l.b16 %v280
      %v480 = vunpack.c.l.b16 %v281
      %v481 = vpack.c.b16 %v446, %v445
      %v482 = vpack.c.b16 %v448, %v447
      %v483 = vpack.c.b16 %v450, %v449
      %v484 = vpack.c.b16 %v452, %v451
      %v485 = vpack.c.b16 %v454, %v453
      %v486 = vpack.c.b16 %v456, %v455
      %v487 = vpack.c.b16 %v458, %v457
      %v488 = vpack.c.b16 %v460, %v459
      %v489 = vpack.c.b16 %v462, %v461
      %v490 = vpack.c.b16 %v464, %v463
      %v491 = vpack.c.b16 %v466, %v465
      %v492 = vpack.c.b16 %v468, %v467
      %v493 = vpack.c.b16 %v470, %v469
      %v494 = vpack.c.b16 %v472, %v471
      %v495 = vpack.c.b16 %v474, %v473
      %v496 = vpack.c.b16 %v476, %v475
      %v497 = vpack.c.b16 %v478, %v477
      %v498 = vpack.c.b16 %v480, %v479
      %vm517 = vcmask 261120
      %v519 = vsel %vm517, %v371, 0
      %v522 = vsel %vm517, %v374, 0
      %v525 = vsel %vm517, %v377, 0
      %v528 = vsel %vm517, %v380, 0
      %v531 = vsel %vm517, %v383, 0
      %v534 = vsel %vm517, %v386, 0
      %v537 = vsel %vm517, %v389, 0
      %v540 = vsel %vm517, %v392, 0
      %542 = vmatprep.subr.bf16.mxu0 0
      %543 = vmatpush1.bf16.msra.mxu0 %v481
      %544 = vmatprep.subr.bf16.mxu0 0
      %545 = vmatpush1.bf16.msra.mxu0 %v482
      %546 = vmatprep.subr.bf16.mxu0 0
      %547 = vmatpush1.bf16.msra.mxu0 %v483
      %548 = vmatprep.subr.bf16.mxu0 0
      %549 = vmatpush1.bf16.msra.mxu0 %v484
      %550 = vmatprep.subr.bf16.mxu0 0
      %551 = vmatpush1.bf16.msra.mxu0 %v485
      %552 = vmatprep.subr.bf16.mxu0 0
      %553 = vmatpush1.bf16.msra.mxu0 %v486
      %554 = vmatprep.subr.bf16.mxu0 0
      %555 = vmatpush1.bf16.msra.mxu0 %v487
      %556 = vmatprep.subr.bf16.mxu0 0
      %557 = vmatpush1.bf16.msra.mxu0 %v488
      %558 = vmatprep.subr.bf16.mxu0 0
      %559 = vmatpush1.bf16.msra.mxu0 %v489
      %560 = vmatprep.subr.bf16.mxu0 0
      %561 = vmatpush1.bf16.msra.mxu0 %v490
      %562 = vmatprep.subr.bf16.mxu0 0
      %563 = vmatpush1.bf16.msra.mxu0 %v491
      %564 = vmatprep.subr.bf16.mxu0 0
      %565 = vmatpush1.bf16.msra.mxu0 %v492
      %566 = vmatprep.subr.bf16.mxu0 0
      %567 = vmatpush1.bf16.msra.mxu0 %v493
      %568 = vmatprep.subr.bf16.mxu0 0
      %569 = vmatpush1.bf16.msra.mxu0 %v494
      %570 = vmatprep.subr.bf16.mxu0 0
      %571 = vmatpush1.bf16.msra.mxu0 %v495
      %572 = vmatprep.subr.bf16.mxu0 0
      %573 = vmatpush1.bf16.msra.mxu0 %v496
      %574 = vmatprep.mubr.bf16.mxu0 %v370
      %575 = vmatmul.mubr.bf16.gmra.mrb[0].mxu0 %v369
      %v576 = vpop.f32.mrb[0].mxu0
      %v577 = vadd.f32 %v287, %v576
      %v578 = vpop.f32.mrb[0].mxu0
      %v579 = vpop.f32.mrb[0].mxu0
      %v580 = vadd.f32 %v287, %v579
      %v581 = vpop.f32.mrb[0].mxu0
      %582 = vmatprep.mubr.bf16.mxu0 %v373
      %583 = vmatmul.mubr.bf16.gmra.mrb[0].mxu0 %v372
      %v584 = vpop.f32.mrb[0].mxu0
      %v585 = vadd.f32 %v287, %v584
      %v586 = vpop.f32.mrb[0].mxu0
      %v587 = vpop.f32.mrb[0].mxu0
      %v588 = vadd.f32 %v287, %v587
      %v589 = vpop.f32.mrb[0].mxu0
      %590 = vmatprep.mubr.bf16.mxu0 %v376
      %591 = vmatmul.mubr.bf16.gmra.mrb[0].mxu0 %v375
      %v592 = vpop.f32.mrb[0].mxu0
      %v593 = vadd.f32 %v287, %v592
      %v594 = vpop.f32.mrb[0].mxu0
      %v595 = vpop.f32.mrb[0].mxu0
      %v596 = vadd.f32 %v287, %v595
      %v597 = vpop.f32.mrb[0].mxu0
      %598 = vmatprep.mubr.bf16.mxu0 %v379
      %599 = vmatmul.mubr.bf16.gmra.mrb[0].mxu0 %v378
      %v600 = vpop.f32.mrb[0].mxu0
      %v601 = vadd.f32 %v287, %v600
      %v602 = vpop.f32.mrb[0].mxu0
      %v603 = vpop.f32.mrb[0].mxu0
      %v604 = vadd.f32 %v287, %v603
      %v605 = vpop.f32.mrb[0].mxu0
      %606 = vmatprep.mubr.bf16.mxu0 %v382
      %607 = vmatmul.mubr.bf16.gmra.mrb[0].mxu0 %v381
      %v608 = vpop.f32.mrb[0].mxu0
      %v609 = vadd.f32 %v287, %v608
      %v610 = vpop.f32.mrb[0].mxu0
      %v611 = vpop.f32.mrb[0].mxu0
      %v612 = vadd.f32 %v287, %v611
      %v613 = vpop.f32.mrb[0].mxu0
      %614 = vmatprep.mubr.bf16.mxu0 %v385
      %615 = vmatmul.mubr.bf16.gmra.mrb[0].mxu0 %v384
      %v616 = vpop.f32.mrb[0].mxu0
      %v617 = vadd.f32 %v287, %v616
      %v618 = vpop.f32.mrb[0].mxu0
      %v619 = vpop.f32.mrb[0].mxu0
      %v620 = vadd.f32 %v287, %v619
      %v621 = vpop.f32.mrb[0].mxu0
      %622 = vmatprep.mubr.bf16.mxu0 %v388
      %623 = vmatmul.mubr.bf16.gmra.mrb[0].mxu0 %v387
      %v624 = vpop.f32.mrb[0].mxu0
      %v625 = vadd.f32 %v287, %v624
      %v626 = vpop.f32.mrb[0].mxu0
      %v627 = vpop.f32.mrb[0].mxu0
      %v628 = vadd.f32 %v287, %v627
      %v629 = vpop.f32.mrb[0].mxu0
      %630 = vmatprep.mubr.bf16.mxu0 %v391
      %631 = vmatmul.mubr.bf16.gmra.mrb[0].mxu0 %v390
      %v632 = vpop.f32.mrb[0].mxu0
      %v633 = vadd.f32 %v287, %v632
      %v634 = vpop.f32.mrb[0].mxu0
      %v635 = vpop.f32.mrb[0].mxu0
      %v636 = vadd.f32 %v287, %v635
      %v637 = vpop.f32.mrb[0].mxu0
      %638 = vdwg.mxu0
      %639 = vmatprep.subr.bf16.mxu0 0
      %640 = vmatpush1.bf16.msra.mxu0 %v497
      %641 = vmatprep.subr.bf16.mxu0 0
      %642 = vmatpush1.bf16.msra.mxu0 %v498
      %643 = vmatprep.subr.bf16.mxu0 0
      %644 = vmatpush1.bf16.msra.mxu0 0
      %645 = vmatprep.subr.bf16.mxu0 0
      %646 = vmatpush1.bf16.msra.mxu0 0
      %647 = vmatprep.subr.bf16.mxu0 0
      %648 = vmatpush1.bf16.msra.mxu0 0
      %649 = vmatprep.subr.bf16.mxu0 0
      %650 = vmatpush1.bf16.msra.mxu0 0
      %651 = vmatprep.subr.bf16.mxu0 0
      %652 = vmatpush1.bf16.msra.mxu0 0
      %653 = vmatprep.subr.bf16.mxu0 0
      %654 = vmatpush1.bf16.msra.mxu0 0
      %655 = vmatprep.subr.bf16.mxu0 0
      %656 = vmatpush1.bf16.msra.mxu0 0
      %657 = vmatprep.subr.bf16.mxu0 0
      %658 = vmatpush1.bf16.msra.mxu0 0
      %659 = vmatprep.subr.bf16.mxu0 0
      %660 = vmatpush1.bf16.msra.mxu0 0
      %661 = vmatprep.subr.bf16.mxu0 0
      %662 = vmatpush1.bf16.msra.mxu0 0
      %663 = vmatprep.subr.bf16.mxu0 0
      %664 = vmatpush1.bf16.msra.mxu0 0
      %665 = vmatprep.subr.bf16.mxu0 0
      %666 = vmatpush1.bf16.msra.mxu0 0
      %667 = vmatprep.subr.bf16.mxu0 0
      %668 = vmatpush1.bf16.msra.mxu0 0
      %669 = vmatprep.subr.bf16.mxu0 0
      %670 = vmatpush1.bf16.msra.mxu0 0
      %671 = vmatprep.mubr.bf16.mxu0 0
      %672 = vmatmul.mubr.bf16.gmra.mrb[0].mxu0 %v519
      %v673 = vpop.f32.mrb[0].mxu0
      %v674 = vadd.f32 %v577, %v673
      %v675 = vpop.f32.mrb[0].mxu0
      %v676 = vpop.f32.mrb[0].mxu0
      %v677 = vadd.f32 %v580, %v676
      %v678 = vpop.f32.mrb[0].mxu0
      %679 = vmatprep.mubr.bf16.mxu0 0
      %680 = vmatmul.mubr.bf16.gmra.mrb[0].mxu0 %v522
      %v681 = vpop.f32.mrb[0].mxu0
      %v682 = vadd.f32 %v585, %v681
      %v683 = vpop.f32.mrb[0].mxu0
      %v684 = vpop.f32.mrb[0].mxu0
      %v685 = vadd.f32 %v588, %v684
      %v686 = vpop.f32.mrb[0].mxu0
      %687 = vmatprep.mubr.bf16.mxu0 0
      %688 = vmatmul.mubr.bf16.gmra.mrb[0].mxu0 %v525
      %v689 = vpop.f32.mrb[0].mxu0
      %v690 = vadd.f32 %v593, %v689
      %v691 = vpop.f32.mrb[0].mxu0
      %v692 = vpop.f32.mrb[0].mxu0
      %v693 = vadd.f32 %v596, %v692
      %v694 = vpop.f32.mrb[0].mxu0
      %695 = vmatprep.mubr.bf16.mxu0 0
      %696 = vmatmul.mubr.bf16.gmra.mrb[0].mxu0 %v528
      %v697 = vpop.f32.mrb[0].mxu0
      %v698 = vadd.f32 %v601, %v697
      %v699 = vpop.f32.mrb[0].mxu0
      %v700 = vpop.f32.mrb[0].mxu0
      %v701 = vadd.f32 %v604, %v700
      %v702 = vpop.f32.mrb[0].mxu0
      %703 = vmatprep.mubr.bf16.mxu0 0
      %704 = vmatmul.mubr.bf16.gmra.mrb[0].mxu0 %v531
      %v705 = vpop.f32.mrb[0].mxu0
      %v706 = vadd.f32 %v609, %v705
      %v707 = vpop.f32.mrb[0].mxu0
      %v708 = vpop.f32.mrb[0].mxu0
      %v709 = vadd.f32 %v612, %v708
      %v710 = vpop.f32.mrb[0].mxu0
      %711 = vmatprep.mubr.bf16.mxu0 0
      %712 = vmatmul.mubr.bf16.gmra.mrb[0].mxu0 %v534
      %v713 = vpop.f32.mrb[0].mxu0
      %v714 = vadd.f32 %v617, %v713
      %v715 = vpop.f32.mrb[0].mxu0
      %v716 = vpop.f32.mrb[0].mxu0
      %v717 = vadd.f32 %v620, %v716
      %v718 = vpop.f32.mrb[0].mxu0
      %719 = vmatprep.mubr.bf16.mxu0 0
      %720 = vmatmul.mubr.bf16.gmra.mrb[0].mxu0 %v537
      %v721 = vpop.f32.mrb[0].mxu0
      %v722 = vadd.f32 %v625, %v721
      %v723 = vpop.f32.mrb[0].mxu0
      %v724 = vpop.f32.mrb[0].mxu0
      %v725 = vadd.f32 %v628, %v724
      %v726 = vpop.f32.mrb[0].mxu0
      %727 = vmatprep.mubr.bf16.mxu0 0
      %728 = vmatmul.mubr.bf16.gmra.mrb[0].mxu0 %v540
      %v729 = vpop.f32.mrb[0].mxu0
      %v730 = vadd.f32 %v633, %v729
      %v731 = vpop.f32.mrb[0].mxu0
      %v732 = vpop.f32.mrb[0].mxu0
      %v733 = vadd.f32 %v636, %v732
      %v734 = vpop.f32.mrb[0].mxu0
      %735 = vdwg.mxu0
      %736 = vst [vmem:[%s211] sm:$0xff] %v674
      %737 = vst [vmem:[%s211 + $0x8] sm:$0xff] %v677
      %738 = vst [vmem:[%s211 + $0x10] sm:$0xff] %v682
      %739 = vst [vmem:[%s211 + $0x18] sm:$0xff] %v685
      %740 = vst [vmem:[%s211 + $0x20] sm:$0xff] %v690
      %741 = vst [vmem:[%s211 + $0x28] sm:$0xff] %v693
      %742 = vst [vmem:[%s211 + $0x30] sm:$0xff] %v698
      %743 = vst [vmem:[%s211 + $0x38] sm:$0xff] %v701
      %744 = vst [vmem:[%s211 + $0x40] sm:$0xff] %v706
      %745 = vst [vmem:[%s211 + $0x48] sm:$0xff] %v709
      %746 = vst [vmem:[%s211 + $0x50] sm:$0xff] %v714
      %747 = vst [vmem:[%s211 + $0x58] sm:$0xff] %v717
      %748 = vst [vmem:[%s211 + $0x60] sm:$0xff] %v722
      %749 = vst [vmem:[%s211 + $0x68] sm:$0xff] %v725
      %750 = vst [vmem:[%s211 + $0x70] sm:$0xff] %v730
      %751 = vst [vmem:[%s211 + $0x78] sm:$0xff] %v733
      %s752 = smul.u32 16, %s19
      %p753 = scmp.lt.s32.totalorder %s18, 1
      %s754 = scalar_select %p753, %s18, 1
      %p755 = scmp.lt.s32.totalorder %s752, 31
      %s756 = scalar_select %p755, %s752, 31
      %s757 = smul.addr %s754, 32
      %s758 = sadd.s32 %s756, %s757
      %s759 = smul.addr %s758, 8
      %s760 = scalar_lea.vmem %s3, %s759
      // Predicated region
      $region33: #{upsample.1} parent=31 // pred_check
        %p761 = pneg %p116
      $region34: #{upsample.1} parent=31 // pred_check_branch
        %763 = sbr.rel (%p761) target = $region36
      $region35: #{upsample.1} parent=31 // pred_region
        %s764 = smul.u32 16, %s19
      $region36: #{upsample.1} parent=31 // pred_fallthru
        _
    $region32: #{upsample.1} parent=5 // pred_fallthru
      _
    %p765 = scmp.le.s32.totalorder 2, %s9
    // Predicated region
    $region37: #{upsample.1} parent=5 // pred_check
      %p766 = pneg %p765
    $region38: #{upsample.1} parent=5 // pred_check_branch
      %768 = sbr.rel (%p766) target = $region40
    $region39: #{upsample.1} parent=5 // pred_region
      %s769 = ssub.s32 %s9, 2
      // Predicated region
      $region41: #{upsample.1} parent=39 // pred_check
        %p770 = pneg %p122
      $region42: #{upsample.1} parent=39 // pred_check_branch
        %772 = sbr.rel (%p770) target = $region44
      $region43: #{upsample.1} parent=39 // pred_region
        %s773 = smul.u32 16, %s21
        %p774 = scmp.lt.s32.totalorder %s20, 1
        %s775 = scalar_select %p774, %s20, 1
        %p776 = scmp.lt.s32.totalorder %s773, 31
        %s777 = scalar_select %p776, %s773, 31
        %s778 = smul.addr %s775, 32
        %s779 = sadd.s32 %s777, %s778
        %s780 = smul.addr %s779, 8
        %s781 = scalar_lea.vmem %s3, %s780
      $region44: #{upsample.1} parent=39 // pred_fallthru
        _
    $region40: #{upsample.1} parent=5 // pred_fallthru
      _
  $region6: #{upsample.1} parent=0 // loop_footer
    %s13 = sadd.s32 1, %s9
  $region7: #{upsample.1} parent=0 // loop_footer_branch
    %8 = sbr.rel target = $region3
  $region8: #{upsample.1} parent=0 // loop_exit
    _

</llo_original>
